<compile_context>
chip_gen: v5e
topology: v5e:2x2
jax: 0.10.0
libtpu: 0.0.40
codegen_flags: <defaults>
</compile_context>

<pallas_src>
import math
from functools import partial

import jax
import jax.numpy as jnp
from jax.experimental import pallas as pl
from jax.experimental.pallas import tpu as pltpu

LANE = 128   # lane width: all feature dims are zero-padded to this
SUB = 8      # sublane granularity (bias rows are allocated 8 rows apiece)


# ---------------------------------------------------------------------------
# Fused MLP kernel: all layers statically unrolled, single invocation,
# everything VMEM-resident. Params come in as one packed slab.
# ---------------------------------------------------------------------------
def _make_mlp_kernel(num_layers):
    def kernel(x_ref, p_ref, out_ref):
        h = x_ref[...]                                         # (N_pad, 128) f32
        bias_base = num_layers * LANE
        for i in range(num_layers):                            # static unroll
            w = p_ref[i * LANE:(i + 1) * LANE, :]              # (128, 128) = W_i^T (padded)
            b = p_ref[bias_base + i * SUB:bias_base + i * SUB + 1, :]   # (1, 128)
            h = jnp.dot(h, w, preferred_element_type=jnp.float32) + b
            if i < num_layers - 1:
                h = jnp.maximum(h, 0.0)                        # ReLU between layers only
        out_ref[...] = h.astype(out_ref.dtype)

    return kernel


# ---------------------------------------------------------------------------
# Host-side parameter packing: PyTorch-layout (out, in) weights + (out,) biases
# -> one (num_layers*128 + num_layers*8, 128) f32 slab.
#   rows [i*128, i*128+n_in)             : layer-i W^T, zero-padded to 128 lanes
#   row   num_layers*128 + i*8           : layer-i bias, zero-padded to 128 lanes
# Zero padding is exact: padded input columns hit zero weight rows, padded
# output columns get zero weights + zero bias, so slicing [..., :out_dim]
# recovers the unpadded result (including zero_init channels 0/1).
# ---------------------------------------------------------------------------
def pack_params(ws, bs):
    num_layers = len(ws)
    rows = num_layers * LANE + num_layers * SUB
    slab = jnp.zeros((rows, LANE), jnp.float32)
    for i, (w, b) in enumerate(zip(ws, bs)):
        n_out, n_in = w.shape
        assert n_in <= LANE and n_out <= LANE, "feature dim exceeds 128-lane pad"
        slab = slab.at[i * LANE:i * LANE + n_in, :n_out].set(w.T.astype(jnp.float32))
        slab = slab.at[num_layers * LANE + i * SUB, :n_out].set(b.astype(jnp.float32))
    return slab


# ---------------------------------------------------------------------------
# pallas_call wrapper (grid-less, whole-array VMEM operands).
# ---------------------------------------------------------------------------
@partial(jax.jit, static_argnames=("num_layers", "out_dim"))
def mlp_forward(x, param_slab, *, num_layers, out_dim):
    """x: (..., input_dim). param_slab: packed (K, 128) f32 from pack_params."""
    lead = x.shape[:-1]
    in_dim = x.shape[-1]
    n = 1
    for d in lead:
        n *= d
    n_pad = max(SUB, ((n + SUB - 1) // SUB) * SUB)             # sublane-dense rows

    # VMEM fit guard (static shapes -> plain Python check at trace time).
    vmem_bytes = (n_pad * LANE + param_slab.shape[0] * LANE + n_pad * LANE) * 4
    assert vmem_bytes < 32 * 1024 * 1024, (
        "activation/param slab would exceed the 32 MiB scoped VMEM budget; "
        "add a row grid before scaling the batch this far")

    # Lane-dense, zero-padded input slab.
    x2 = jnp.zeros((n_pad, LANE), jnp.float32)
    x2 = x2.at[:n, :in_dim].set(x.reshape(n, in_dim).astype(jnp.float32))

    y2 = pl.pallas_call(
        _make_mlp_kernel(num_layers),
        out_shape=jax.ShapeDtypeStruct((n_pad, LANE), jnp.float32),
        in_specs=[pl.BlockSpec(memory_space=pltpu.MemorySpace.VMEM),
                  pl.BlockSpec(memory_space=pltpu.MemorySpace.VMEM)],
        out_specs=pl.BlockSpec(memory_space=pltpu.MemorySpace.VMEM),
        compiler_params=pltpu.CompilerParams(vmem_limit_bytes=32 * 1024 * 1024),
    )(x2, param_slab)

    return y2[:n, :out_dim].astype(x.dtype).reshape(*lead, out_dim)


# ---------------------------------------------------------------------------
# Parameter init matching the PyTorch module (nn.Linear uniform init +
# zero_init surgery on the last layer), stored in PyTorch (out, in) layout.
# ---------------------------------------------------------------------------
def init_mlp_params(key, input_dim, hidden_dim, output_dim, num_layers,
                    zero_init=True):
    h = [hidden_dim] * (num_layers - 1)
    dims_in = [input_dim] + h
    dims_out = h + [output_dim]
    keys = jax.random.split(key, 2 * num_layers)
    ws, bs = [], []
    for i, (n_in, n_out) in enumerate(zip(dims_in, dims_out)):
        bound = 1.0 / math.sqrt(n_in)
        w = jax.random.uniform(keys[2 * i], (n_out, n_in), jnp.float32,
                               -bound, bound)
        b = jax.random.uniform(keys[2 * i + 1], (n_out,), jnp.float32,
                               -bound, bound)
        if i == num_layers - 1 and zero_init:
            w = w.at[0].set(0.0)
            w = w.at[1].set(0.0)
            b = b.at[0].set(0.0)
            b = b.at[1].set(1.0)
        ws.append(w)
        bs.append(b)
    return ws, bs


# ---------------------------------------------------------------------------
# Pure-JAX reference (PyTorch-layout weights) for correctness checking.
# ---------------------------------------------------------------------------
def ref_mlp(x, ws, bs):
    h = x
    for i, (w, b) in enumerate(zip(ws, bs)):
        h = h @ w.T + b
        if i < len(ws) - 1:
            h = jax.nn.relu(h)
    return h


if __name__ == "__main__":
    key = jax.random.PRNGKey(0)
    k_x, k_p = jax.random.split(key)

    # Small shapes consistent with the module: MLP(32, 64, 32, num_layers=3),
    # input batch (8, 16, 32) -> flattened to a (128, 128)-padded slab.
    INPUT_DIM, HIDDEN_DIM, OUTPUT_DIM, NUM_LAYERS = 32, 64, 32, 3
    x = jax.random.normal(k_x, (8, 16, INPUT_DIM), jnp.float32)

    ws, bs = init_mlp_params(k_p, INPUT_DIM, HIDDEN_DIM, OUTPUT_DIM,
                             NUM_LAYERS, zero_init=True)

    # Host-side layout prep: one packed, lane-dense parameter slab.
    param_slab = pack_params(ws, bs)

    y = mlp_forward(x, param_slab, num_layers=NUM_LAYERS, out_dim=OUTPUT_DIM)
    y = jax.block_until_ready(y)

    y_ref = ref_mlp(x, ws, bs)
    assert y.shape == y_ref.shape
    assert jnp.allclose(y, y_ref, atol=1e-4, rtol=1e-4), "mismatch vs reference"

    print("KERNEL_OK")
</pallas_src>

<mosaic_0001>
module attributes {stable_mosaic.version = 11 : i64} {
  func.func @kernel(%arg0: memref<128x128xf32, #tpu.memory_space<vmem>>, %arg1: memref<408x128xf32, #tpu.memory_space<vmem>>, %arg2: memref<128x128xf32, #tpu.memory_space<vmem>>) attributes {dimension_semantics = [], scalar_prefetch = 0 : i64, scratch_operands = 0 : i64, tpu.core_type = #tpu.core_type<tc>} {
    %c0 = arith.constant 0 : index
    %c0_0 = arith.constant 0 : index
    %0 = vector.load %arg0[%c0, %c0_0] : memref<128x128xf32, #tpu.memory_space<vmem>>, vector<128x128xf32>
    %c0_1 = arith.constant 0 : index
    %c0_2 = arith.constant 0 : index
    %1 = vector.load %arg1[%c0_1, %c0_2] : memref<408x128xf32, #tpu.memory_space<vmem>>, vector<128x128xf32>
    %c384 = arith.constant 384 : index
    %c0_3 = arith.constant 0 : index
    %2 = vector.load %arg1[%c384, %c0_3] : memref<408x128xf32, #tpu.memory_space<vmem>>, vector<1x128xf32>
    %cst = arith.constant dense<0.000000e+00> : vector<128x128xf32>
    %3 = tpu.matmul %0, %1, %cst {dimension_numbers = #tpu.dot_dimension_numbers<[1], [0], [0], [1], [0, 0, 1, 1], [], []>} : vector<128x128xf32>, vector<128x128xf32>, vector<128x128xf32> -> vector<128x128xf32>
    %4 = vector.broadcast %2 : vector<1x128xf32> to vector<128x128xf32>
    %5 = arith.addf %3, %4 : vector<128x128xf32>
    %cst_4 = arith.constant 0.000000e+00 : f32
    %6 = vector.broadcast %cst_4 : f32 to vector<128x128xf32>
    %7 = arith.maximumf %5, %6 : vector<128x128xf32>
    %c128 = arith.constant 128 : index
    %c0_5 = arith.constant 0 : index
    %8 = vector.load %arg1[%c128, %c0_5] : memref<408x128xf32, #tpu.memory_space<vmem>>, vector<128x128xf32>
    %c392 = arith.constant 392 : index
    %c0_6 = arith.constant 0 : index
    %9 = vector.load %arg1[%c392, %c0_6] : memref<408x128xf32, #tpu.memory_space<vmem>>, vector<1x128xf32>
    %cst_7 = arith.constant dense<0.000000e+00> : vector<128x128xf32>
    %10 = tpu.matmul %7, %8, %cst_7 {dimension_numbers = #tpu.dot_dimension_numbers<[1], [0], [0], [1], [0, 0, 1, 1], [], []>} : vector<128x128xf32>, vector<128x128xf32>, vector<128x128xf32> -> vector<128x128xf32>
    %11 = vector.broadcast %9 : vector<1x128xf32> to vector<128x128xf32>
    %12 = arith.addf %10, %11 : vector<128x128xf32>
    %cst_8 = arith.constant 0.000000e+00 : f32
    %13 = vector.broadcast %cst_8 : f32 to vector<128x128xf32>
    %14 = arith.maximumf %12, %13 : vector<128x128xf32>
    %c256 = arith.constant 256 : index
    %c0_9 = arith.constant 0 : index
    %15 = vector.load %arg1[%c256, %c0_9] : memref<408x128xf32, #tpu.memory_space<vmem>>, vector<128x128xf32>
    %c400 = arith.constant 400 : index
    %c0_10 = arith.constant 0 : index
    %16 = vector.load %arg1[%c400, %c0_10] : memref<408x128xf32, #tpu.memory_space<vmem>>, vector<1x128xf32>
    %cst_11 = arith.constant dense<0.000000e+00> : vector<128x128xf32>
    %17 = tpu.matmul %14, %15, %cst_11 {dimension_numbers = #tpu.dot_dimension_numbers<[1], [0], [0], [1], [0, 0, 1, 1], [], []>} : vector<128x128xf32>, vector<128x128xf32>, vector<128x128xf32> -> vector<128x128xf32>
    %18 = vector.broadcast %16 : vector<1x128xf32> to vector<128x128xf32>
    %19 = arith.addf %17, %18 : vector<128x128xf32>
    %c0_12 = arith.constant 0 : index
    %c0_13 = arith.constant 0 : index
    %20 = vector.load %arg2[%c0_12, %c0_13] : memref<128x128xf32, #tpu.memory_space<vmem>>, vector<128x128xf32>
    tpu.vector_store %arg2[%c0_12, %c0_13], %19 {strides = array<i32>} : memref<128x128xf32, #tpu.memory_space<vmem>>, vector<128x128xf32>,
    return
  }
}

</mosaic_0001>

<llo_original>
// kernel: mlp_forward.1
$region0: #{mlp_forward.1}
  #allocation0 [shape = 'u32[]', space=smem, size = 0x4, offset = 0x4, fixed_abs, tag = 'smem constant byte address 0x4 - core index']
  #allocation1 [shape = 'u32[72,128]{1,0:T(1,128)}', space=vmem, size = 0x9000, scoped, tag = 'internal scratch']
  %s0 = inlined_call_operand.vmem [shape: f32[128,128], index: 0, kind: input, shape index: {}]
  %s1 = inlined_call_operand.vmem [shape: f32[408,128], index: 1, kind: input, shape index: {}]
  %s2 = inlined_call_operand.hbm [shape: f32[128,128], index: 2, kind: output, shape index: {}]
  %s3 = sld [smem:[#allocation0]]
  $region18: #{mlp_forward.1} parent=0
    _
  %s5 = ssub.s32 1, %s3
  %s6 = scalar_select 0, %s5, %s3
  $region1: #{mlp_forward.1} parent=0
    #allocation2 [shape = 'u8[65536]{0}', space=vmem, size = 0x10000, scoped, tag = 'output window, operand 0, single buffered']
    #allocation3 [shape = 's32[1]{0}', space=sflag, size = 0x4, scoped, tag = 'scoped memory for mlp_forward.1']
    %7 = vsyncpa [#allocation3], 0
    // Predicated region
    $region2: #{mlp_forward.1} parent=1 // pred_check
      _
    $region3: #{mlp_forward.1} parent=1 // pred_check_branch
      %9 = sbr.rel (0) target = $region5
    $region4: #{mlp_forward.1} parent=1 // pred_region
      _
    $region5: #{mlp_forward.1} parent=1 // pred_fallthru
      _
    // Predicated region
    $region6: #{mlp_forward.1} parent=1 // pred_check
      _
    $region7: #{mlp_forward.1} parent=1 // pred_check_branch
      %11 = sbr.rel (0) target = $region9
    $region8: #{mlp_forward.1} parent=1 // pred_region
      _
    $region9: #{mlp_forward.1} parent=1 // pred_fallthru
      _
    %v12 = vld [vmem:[%s0] sm:$0xff]
    %v13 = vld [vmem:[%s0 + $0x8] sm:$0xff]
    %v14 = vld [vmem:[%s0 + $0x10] sm:$0xff]
    %v15 = vld [vmem:[%s0 + $0x18] sm:$0xff]
    %v16 = vld [vmem:[%s0 + $0x20] sm:$0xff]
    %v17 = vld [vmem:[%s0 + $0x28] sm:$0xff]
    %v18 = vld [vmem:[%s0 + $0x30] sm:$0xff]
    %v19 = vld [vmem:[%s0 + $0x38] sm:$0xff]
    %v20 = vld [vmem:[%s0 + $0x40] sm:$0xff]
    %v21 = vld [vmem:[%s0 + $0x48] sm:$0xff]
    %v22 = vld [vmem:[%s0 + $0x50] sm:$0xff]
    %v23 = vld [vmem:[%s0 + $0x58] sm:$0xff]
    %v24 = vld [vmem:[%s0 + $0x60] sm:$0xff]
    %v25 = vld [vmem:[%s0 + $0x68] sm:$0xff]
    %v26 = vld [vmem:[%s0 + $0x70] sm:$0xff]
    %v27 = vld [vmem:[%s0 + $0x78] sm:$0xff]
    %v28 = vld [vmem:[%s1] sm:$0xff]
    %v29 = vld [vmem:[%s1 + $0x8] sm:$0xff]
    %v30 = vld [vmem:[%s1 + $0x10] sm:$0xff]
    %v31 = vld [vmem:[%s1 + $0x18] sm:$0xff]
    %v32 = vld [vmem:[%s1 + $0x20] sm:$0xff]
    %v33 = vld [vmem:[%s1 + $0x28] sm:$0xff]
    %v34 = vld [vmem:[%s1 + $0x30] sm:$0xff]
    %v35 = vld [vmem:[%s1 + $0x38] sm:$0xff]
    %v36 = vld [vmem:[%s1 + $0x40] sm:$0xff]
    %v37 = vld [vmem:[%s1 + $0x48] sm:$0xff]
    %v38 = vld [vmem:[%s1 + $0x50] sm:$0xff]
    %v39 = vld [vmem:[%s1 + $0x58] sm:$0xff]
    %v40 = vld [vmem:[%s1 + $0x60] sm:$0xff]
    %v41 = vld [vmem:[%s1 + $0x68] sm:$0xff]
    %v42 = vld [vmem:[%s1 + $0x70] sm:$0xff]
    %v43 = vld [vmem:[%s1 + $0x78] sm:$0xff]
    %v44 = vld [vmem:[%s1 + $0x180] sm:$0x1]
    %v45 = vperm.slane %v44, 0
    %46 = vmatpush.msra.mxu0 %v43
    %47 = vmatpush.msra.mxu0 %v42
    %48 = vmatpush.msra.mxu0 %v41
    %49 = vmatpush.msra.mxu0 %v40
    %50 = vmatpush.msra.mxu0 %v39
    %51 = vmatpush.msra.mxu0 %v38
    %52 = vmatpush.msra.mxu0 %v37
    %53 = vmatpush.msra.mxu0 %v36
    %54 = vmatpush.msra.mxu0 %v35
    %55 = vmatpush.msra.mxu0 %v34
    %56 = vmatpush.msra.mxu0 %v33
    %57 = vmatpush.msra.mxu0 %v32
    %58 = vmatpush.msra.mxu0 %v31
    %59 = vmatpush.msra.mxu0 %v30
    %60 = vmatpush.msra.mxu0 %v29
    %61 = vmatpush.msra.mxu0 %v28
    %62 = vmatmul.f32.gmra.mxu0 %v12
    %v63 = vpop.f32.mrf.mxu0
    %v64 = vadd.f32 %v45, %v63
    %65 = vmatmul.f32.gmra.mxu0 %v13
    %v66 = vpop.f32.mrf.mxu0
    %v67 = vadd.f32 %v45, %v66
    %68 = vmatmul.f32.gmra.mxu0 %v14
    %v69 = vpop.f32.mrf.mxu0
    %v70 = vadd.f32 %v45, %v69
    %71 = vmatmul.f32.gmra.mxu0 %v15
    %v72 = vpop.f32.mrf.mxu0
    %v73 = vadd.f32 %v45, %v72
    %74 = vmatmul.f32.gmra.mxu0 %v16
    %v75 = vpop.f32.mrf.mxu0
    %v76 = vadd.f32 %v45, %v75
    %77 = vmatmul.f32.gmra.mxu0 %v17
    %v78 = vpop.f32.mrf.mxu0
    %v79 = vadd.f32 %v45, %v78
    %80 = vmatmul.f32.gmra.mxu0 %v18
    %v81 = vpop.f32.mrf.mxu0
    %v82 = vadd.f32 %v45, %v81
    %83 = vmatmul.f32.gmra.mxu0 %v19
    %v84 = vpop.f32.mrf.mxu0
    %v85 = vadd.f32 %v45, %v84
    %86 = vmatmul.f32.gmra.mxu0 %v20
    %v87 = vpop.f32.mrf.mxu0
    %v88 = vadd.f32 %v45, %v87
    %89 = vmatmul.f32.gmra.mxu0 %v21
    %v90 = vpop.f32.mrf.mxu0
    %v91 = vadd.f32 %v45, %v90
    %92 = vmatmul.f32.gmra.mxu0 %v22
    %v93 = vpop.f32.mrf.mxu0
    %v94 = vadd.f32 %v45, %v93
    %95 = vmatmul.f32.gmra.mxu0 %v23
    %v96 = vpop.f32.mrf.mxu0
    %v97 = vadd.f32 %v45, %v96
    %98 = vmatmul.f32.gmra.mxu0 %v24
    %v99 = vpop.f32.mrf.mxu0
    %v100 = vadd.f32 %v45, %v99
    %101 = vmatmul.f32.gmra.mxu0 %v25
    %v102 = vpop.f32.mrf.mxu0
    %v103 = vadd.f32 %v45, %v102
    %104 = vmatmul.f32.gmra.mxu0 %v26
    %v105 = vpop.f32.mrf.mxu0
    %v106 = vadd.f32 %v45, %v105
    %107 = vmatmul.f32.gmra.mxu0 %v27
    %v108 = vpop.f32.mrf.mxu0
    %v109 = vadd.f32 %v45, %v108
    %110 = vdwg.mxu0
    %v111 = vmax.f32 %v64, 0.0
    %v112 = vmax.f32 %v67, 0.0
    %v113 = vmax.f32 %v70, 0.0
    %v114 = vmax.f32 %v73, 0.0
    %v115 = vmax.f32 %v76, 0.0
    %v116 = vmax.f32 %v79, 0.0
    %v117 = vmax.f32 %v82, 0.0
    %v118 = vmax.f32 %v85, 0.0
    %v119 = vmax.f32 %v88, 0.0
    %v120 = vmax.f32 %v91, 0.0
    %v121 = vmax.f32 %v94, 0.0
    %v122 = vmax.f32 %v97, 0.0
    %v123 = vmax.f32 %v100, 0.0
    %v124 = vmax.f32 %v103, 0.0
    %v125 = vmax.f32 %v106, 0.0
    %v126 = vmax.f32 %v109, 0.0
    %v127 = vld [vmem:[%s1 + $0x80] sm:$0xff]
    %v128 = vld [vmem:[%s1 + $0x88] sm:$0xff]
    %v129 = vld [vmem:[%s1 + $0x90] sm:$0xff]
    %v130 = vld [vmem:[%s1 + $0x98] sm:$0xff]
    %v131 = vld [vmem:[%s1 + $0xa0] sm:$0xff]
    %v132 = vld [vmem:[%s1 + $0xa8] sm:$0xff]
    %v133 = vld [vmem:[%s1 + $0xb0] sm:$0xff]
    %v134 = vld [vmem:[%s1 + $0xb8] sm:$0xff]
    %v135 = vld [vmem:[%s1 + $0xc0] sm:$0xff]
    %v136 = vld [vmem:[%s1 + $0xc8] sm:$0xff]
    %v137 = vld [vmem:[%s1 + $0xd0] sm:$0xff]
    %v138 = vld [vmem:[%s1 + $0xd8] sm:$0xff]
    %v139 = vld [vmem:[%s1 + $0xe0] sm:$0xff]
    %v140 = vld [vmem:[%s1 + $0xe8] sm:$0xff]
    %v141 = vld [vmem:[%s1 + $0xf0] sm:$0xff]
    %v142 = vld [vmem:[%s1 + $0xf8] sm:$0xff]
    %v143 = vld [vmem:[%s1 + $0x188] sm:$0x1]
    %v144 = vperm.slane %v143, 0
    %145 = vmatpush.msra.mxu0 %v142
    %146 = vmatpush.msra.mxu0 %v141
    %147 = vmatpush.msra.mxu0 %v140
    %148 = vmatpush.msra.mxu0 %v139
    %149 = vmatpush.msra.mxu0 %v138
    %150 = vmatpush.msra.mxu0 %v137
    %151 = vmatpush.msra.mxu0 %v136
    %152 = vmatpush.msra.mxu0 %v135
    %153 = vmatpush.msra.mxu0 %v134
    %154 = vmatpush.msra.mxu0 %v133
    %155 = vmatpush.msra.mxu0 %v132
    %156 = vmatpush.msra.mxu0 %v131
    %157 = vmatpush.msra.mxu0 %v130
    %158 = vmatpush.msra.mxu0 %v129
    %159 = vmatpush.msra.mxu0 %v128
    %160 = vmatpush.msra.mxu0 %v127
    %161 = vmatmul.f32.gmra.mxu0 %v111
    %v162 = vpop.f32.mrf.mxu0
    %v163 = vadd.f32 %v144, %v162
    %164 = vmatmul.f32.gmra.mxu0 %v112
    %v165 = vpop.f32.mrf.mxu0
    %v166 = vadd.f32 %v144, %v165
    %167 = vmatmul.f32.gmra.mxu0 %v113
    %v168 = vpop.f32.mrf.mxu0
    %v169 = vadd.f32 %v144, %v168
    %170 = vmatmul.f32.gmra.mxu0 %v114
    %v171 = vpop.f32.mrf.mxu0
    %v172 = vadd.f32 %v144, %v171
    %173 = vmatmul.f32.gmra.mxu0 %v115
    %v174 = vpop.f32.mrf.mxu0
    %v175 = vadd.f32 %v144, %v174
    %176 = vmatmul.f32.gmra.mxu0 %v116
    %v177 = vpop.f32.mrf.mxu0
    %v178 = vadd.f32 %v144, %v177
    %179 = vmatmul.f32.gmra.mxu0 %v117
    %v180 = vpop.f32.mrf.mxu0
    %v181 = vadd.f32 %v144, %v180
    %182 = vmatmul.f32.gmra.mxu0 %v118
    %v183 = vpop.f32.mrf.mxu0
    %v184 = vadd.f32 %v144, %v183
    %185 = vmatmul.f32.gmra.mxu0 %v119
    %v186 = vpop.f32.mrf.mxu0
    %v187 = vadd.f32 %v144, %v186
    %188 = vmatmul.f32.gmra.mxu0 %v120
    %v189 = vpop.f32.mrf.mxu0
    %v190 = vadd.f32 %v144, %v189
    %191 = vmatmul.f32.gmra.mxu0 %v121
    %v192 = vpop.f32.mrf.mxu0
    %v193 = vadd.f32 %v144, %v192
    %194 = vmatmul.f32.gmra.mxu0 %v122
    %v195 = vpop.f32.mrf.mxu0
    %v196 = vadd.f32 %v144, %v195
    %197 = vmatmul.f32.gmra.mxu0 %v123
    %v198 = vpop.f32.mrf.mxu0
    %v199 = vadd.f32 %v144, %v198
    %200 = vmatmul.f32.gmra.mxu0 %v124
    %v201 = vpop.f32.mrf.mxu0
    %v202 = vadd.f32 %v144, %v201
    %203 = vmatmul.f32.gmra.mxu0 %v125
    %v204 = vpop.f32.mrf.mxu0
    %v205 = vadd.f32 %v144, %v204
    %206 = vmatmul.f32.gmra.mxu0 %v126
    %v207 = vpop.f32.mrf.mxu0
    %v208 = vadd.f32 %v144, %v207
    %209 = vdwg.mxu0
    %v210 = vmax.f32 %v163, 0.0
    %v211 = vmax.f32 %v166, 0.0
    %v212 = vmax.f32 %v169, 0.0
    %v213 = vmax.f32 %v172, 0.0
    %v214 = vmax.f32 %v175, 0.0
    %v215 = vmax.f32 %v178, 0.0
    %v216 = vmax.f32 %v181, 0.0
    %v217 = vmax.f32 %v184, 0.0
    %v218 = vmax.f32 %v187, 0.0
    %v219 = vmax.f32 %v190, 0.0
    %v220 = vmax.f32 %v193, 0.0
    %v221 = vmax.f32 %v196, 0.0
    %v222 = vmax.f32 %v199, 0.0
    %v223 = vmax.f32 %v202, 0.0
    %v224 = vmax.f32 %v205, 0.0
    %v225 = vmax.f32 %v208, 0.0
    %v226 = vld [vmem:[%s1 + $0x100] sm:$0xff]
    %v227 = vld [vmem:[%s1 + $0x108] sm:$0xff]
    %v228 = vld [vmem:[%s1 + $0x110] sm:$0xff]
    %v229 = vld [vmem:[%s1 + $0x118] sm:$0xff]
    %v230 = vld [vmem:[%s1 + $0x120] sm:$0xff]
    %v231 = vld [vmem:[%s1 + $0x128] sm:$0xff]
    %v232 = vld [vmem:[%s1 + $0x130] sm:$0xff]
    %v233 = vld [vmem:[%s1 + $0x138] sm:$0xff]
    %v234 = vld [vmem:[%s1 + $0x140] sm:$0xff]
    %v235 = vld [vmem:[%s1 + $0x148] sm:$0xff]
    %v236 = vld [vmem:[%s1 + $0x150] sm:$0xff]
    %v237 = vld [vmem:[%s1 + $0x158] sm:$0xff]
    %v238 = vld [vmem:[%s1 + $0x160] sm:$0xff]
    %v239 = vld [vmem:[%s1 + $0x168] sm:$0xff]
    %v240 = vld [vmem:[%s1 + $0x170] sm:$0xff]
    %v241 = vld [vmem:[%s1 + $0x178] sm:$0xff]
    %v242 = vld [vmem:[%s1 + $0x190] sm:$0x1]
    %v243 = vperm.slane %v242, 0
    %244 = vmatpush.msra.mxu0 %v241
    %245 = vmatpush.msra.mxu0 %v240
    %246 = vmatpush.msra.mxu0 %v239
    %247 = vmatpush.msra.mxu0 %v238
    %248 = vmatpush.msra.mxu0 %v237
    %249 = vmatpush.msra.mxu0 %v236
    %250 = vmatpush.msra.mxu0 %v235
    %251 = vmatpush.msra.mxu0 %v234
    %252 = vmatpush.msra.mxu0 %v233
    %253 = vmatpush.msra.mxu0 %v232
    %254 = vmatpush.msra.mxu0 %v231
    %255 = vmatpush.msra.mxu0 %v230
    %256 = vmatpush.msra.mxu0 %v229
    %257 = vmatpush.msra.mxu0 %v228
    %258 = vmatpush.msra.mxu0 %v227
    %259 = vmatpush.msra.mxu0 %v226
    %260 = vmatmul.f32.gmra.mxu0 %v210
    %v261 = vpop.f32.mrf.mxu0
    %v262 = vadd.f32 %v243, %v261
    %263 = vmatmul.f32.gmra.mxu0 %v211
    %v264 = vpop.f32.mrf.mxu0
    %v265 = vadd.f32 %v243, %v264
    %266 = vmatmul.f32.gmra.mxu0 %v212
    %v267 = vpop.f32.mrf.mxu0
    %v268 = vadd.f32 %v243, %v267
    %269 = vmatmul.f32.gmra.mxu0 %v213
    %v270 = vpop.f32.mrf.mxu0
    %v271 = vadd.f32 %v243, %v270
    %272 = vmatmul.f32.gmra.mxu0 %v214
    %v273 = vpop.f32.mrf.mxu0
    %v274 = vadd.f32 %v243, %v273
    %275 = vmatmul.f32.gmra.mxu0 %v215
    %v276 = vpop.f32.mrf.mxu0
    %v277 = vadd.f32 %v243, %v276
    %278 = vmatmul.f32.gmra.mxu0 %v216
    %v279 = vpop.f32.mrf.mxu0
    %v280 = vadd.f32 %v243, %v279
    %281 = vmatmul.f32.gmra.mxu0 %v217
    %v282 = vpop.f32.mrf.mxu0
    %v283 = vadd.f32 %v243, %v282
    %284 = vmatmul.f32.gmra.mxu0 %v218
    %v285 = vpop.f32.mrf.mxu0
    %v286 = vadd.f32 %v243, %v285
    %287 = vmatmul.f32.gmra.mxu0 %v219
    %v288 = vpop.f32.mrf.mxu0
    %v289 = vadd.f32 %v243, %v288
    %290 = vmatmul.f32.gmra.mxu0 %v220
    %v291 = vpop.f32.mrf.mxu0
    %v292 = vadd.f32 %v243, %v291
    %293 = vmatmul.f32.gmra.mxu0 %v221
    %v294 = vpop.f32.mrf.mxu0
    %v295 = vadd.f32 %v243, %v294
    %296 = vmatmul.f32.gmra.mxu0 %v222
    %v297 = vpop.f32.mrf.mxu0
    %v298 = vadd.f32 %v243, %v297
    %299 = vmatmul.f32.gmra.mxu0 %v223
    %v300 = vpop.f32.mrf.mxu0
    %v301 = vadd.f32 %v243, %v300
    %302 = vmatmul.f32.gmra.mxu0 %v224
    %v303 = vpop.f32.mrf.mxu0
    %v304 = vadd.f32 %v243, %v303
    %305 = vmatmul.f32.gmra.mxu0 %v225
    %v306 = vpop.f32.mrf.mxu0
    %v307 = vadd.f32 %v243, %v306
    %308 = vdwg.mxu0
    %309 = vst [vmem:[#allocation2] sm:$0xff] %v262
    %310 = vst [vmem:[#allocation2 + $0x8] sm:$0xff] %v265
    %311 = vst [vmem:[#allocation2 + $0x10] sm:$0xff] %v268
    %312 = vst [vmem:[#allocation2 + $0x18] sm:$0xff] %v271
    %313 = vst [vmem:[#allocation2 + $0x20] sm:$0xff] %v274
    %314 = vst [vmem:[#allocation2 + $0x28] sm:$0xff] %v277
    %315 = vst [vmem:[#allocation2 + $0x30] sm:$0xff] %v280
    %316 = vst [vmem:[#allocation2 + $0x38] sm:$0xff] %v283
    %317 = vst [vmem:[#allocation2 + $0x40] sm:$0xff] %v286
    %318 = vst [vmem:[#allocation2 + $0x48] sm:$0xff] %v289
    %319 = vst [vmem:[#allocation2 + $0x50] sm:$0xff] %v292
    %320 = vst [vmem:[#allocation2 + $0x58] sm:$0xff] %v295
    %321 = vst [vmem:[#allocation2 + $0x60] sm:$0xff] %v298
    %322 = vst [vmem:[#allocation2 + $0x68] sm:$0xff] %v301
    %323 = vst [vmem:[#allocation2 + $0x70] sm:$0xff] %v304
    %324 = vst [vmem:[#allocation2 + $0x78] sm:$0xff] %v307
    // Predicated region
    $region10: #{mlp_forward.1} parent=1 // pred_check
      _
    $region11: #{mlp_forward.1} parent=1 // pred_check_branch
      %326 = sbr.rel (0) target = $region13
    $region12: #{mlp_forward.1} parent=1 // pred_region
      %328 = vsyncadd [#allocation3], 0
      %s329 = sshll.u32 [#allocation2], 4
      %s330 = int_to_ptr.vmem [resolvable:$true] %s329
      %s331 = sshll.u32 %s2, 4
      %s332 = int_to_ptr.hbm [resolvable:$true] %s331
      %337 = dma.vmem_to_hbm [thread:$0]  %s330, 2048, %s332, [#allocation3], 128, 128, 8
    $region13: #{mlp_forward.1} parent=1 // pred_fallthru
      _
    // Predicated region
    $region14: #{mlp_forward.1} parent=1 // pred_check
      _
    $region15: #{mlp_forward.1} parent=1 // pred_check_branch
      %339 = sbr.rel (0) target = $region17
    $region16: #{mlp_forward.1} parent=1 // pred_region
      %341 = dma.done [#allocation3], 2048
    $region17: #{mlp_forward.1} parent=1 // pred_fallthru
      _
    %342 = vsyncpa [#allocation3], 1

</llo_original>
